<compile_context>
chip_gen: v7x
topology: tpu7x:2x2x1
jax: 0.10.0
libtpu: 0.0.40
codegen_flags: <defaults>
</compile_context>

<pallas_src>
import jax
import jax.numpy as jnp
from jax.experimental import pallas as pl
from jax.experimental.pallas import tpu as pltpu

C_IN, L_IN = 16, 49          # input to f0 (after view)
C0, K0 = 14, 3               # f0: Conv1d(16 -> 14, k=3, no bias)
L0 = L_IN - K0 + 1           # 47
C1, K1 = 10, 47              # f1: Conv1d(14 -> 10, k=47, bias) -> length 1
N_H = 73                     # f2: Linear(10 -> 73, no bias)
N_H_PAD = 128                # hidden dim padded to full lanes
N_OUT = 10                   # f4: Linear(73 -> 10, no bias)
D_IN = C_IN * L_IN           # 784


def _round_up(n, m):
    return (n + m - 1) // m * m


def _kernel(x_ref, wa_ref, ba_ref, w4t_ref, out_ref):
    # Folded f0∘f1∘f2: one (TB,784)x(784,128) MXU matmul, bf16 operands / f32 acc.
    x = x_ref[...].astype(jnp.bfloat16)                       # cast in VMEM (no HBM pass)
    t = jnp.dot(x, wa_ref[...], preferred_element_type=jnp.float32)   # (TB, 128)
    t = t + ba_ref[...]                                       # folded bias (1, 128)

    # f3: Sigmoid — keep both exp and divide on the EUP slot.
    z = pl.reciprocal(1.0 + jnp.exp(-t), approx=True)         # (TB, 128)

    # f4: Linear(73 -> 10, no bias). Padded hidden cols hit zero rows of w4t -> 0.
    logits = jnp.dot(z.astype(jnp.bfloat16), w4t_ref[...],
                     preferred_element_type=jnp.float32)      # (TB, 10)

    # f5: LogSoftmax(dim=1) — purely row-wise, safe for ragged last tile.
    m = jnp.max(logits, axis=-1, keepdims=True)
    s = logits - m
    lse = jnp.log(jnp.sum(jnp.exp(s), axis=-1, keepdims=True))
    out_ref[...] = s - lse                                    # (TB, 10)


def _fold_weights(w0, w1, b1, w2):
    """Fold conv0 ∘ conv1 ∘ linear2 (all linear in x) into W_a (784,73), b_a (73,).

    y[b, o] = sum_{ci,l} M[o, ci, l] * x[b, ci, l] + b1[o]
    with M[o, ci, l] = sum_{c0, k, p : p+k=l} w1[o, c0, p] * w0[c0, ci, k]
    then t = y @ w2.T  =>  t = x_flat @ (M_flat.T @ w2.T) + b1 @ w2.T
    """
    w0f = w0.astype(jnp.float32)
    w1f = w1.astype(jnp.float32)
    w2f = w2.astype(jnp.float32)
    # W01[o, ci, k, p] = sum_c0 w1[o, c0, p] * w0[c0, ci, k]   -> (10, 16, 3, 47)
    W01 = jnp.einsum('ocp,cik->oikp', w1f, w0f)
    M = jnp.zeros((C1, C_IN, L_IN), jnp.float32)
    for k in range(K0):
        M = M.at[:, :, k:k + K1].add(W01[:, :, k, :])
    M_flat = M.reshape(C1, D_IN)                 # (10, 784)
    W_a = M_flat.T @ w2f.T                       # (784, 73)
    b_a = b1.astype(jnp.float32) @ w2f.T         # (73,)
    return W_a, b_a


def make_conv1d_then_linear_64(w0, w1, b1, w2, w4):
    """Fold & pad weights ONCE (outside the per-call jit path); return jitted forward."""
    W_a, b_a = _fold_weights(w0, w1, b1, w2)
    wa_p = jnp.pad(W_a, ((0, 0), (0, N_H_PAD - N_H))).astype(jnp.bfloat16)     # (784,128)
    ba_p = jnp.pad(b_a, (0, N_H_PAD - N_H)).reshape(1, N_H_PAD)                # (1,128) f32
    w4t_p = jnp.pad(w4.astype(jnp.float32).T,
                    ((0, N_H_PAD - N_H), (0, 0))).astype(jnp.bfloat16)         # (128,10)

    @jax.jit
    def forward(x):
        B = x.shape[0]
        x_flat = x.reshape(B, D_IN).astype(jnp.float32)        # view(B, 16*49), f32 in

        # Pad the batch only to a sublane multiple (<= 7 extra rows; no-op for
        # batch sizes already divisible by 8 -> no extra HBM pass).
        B_pad = _round_up(B, 8)
        if B_pad != B:
            x_flat = jnp.pad(x_flat, ((0, B_pad - B), (0, 0)))

        # Batch tile: large enough to amortize per-step overhead, small enough
        # for every generation's default scoped VMEM (TB=1024 f32 x-tile is
        # ~3.1 MiB x 2 buffers); for B >= 256 keep grid length >= 2 so both
        # v7x TensorCores get work via dimension_semantics=("parallel",).
        TB = min(1024, B_pad)
        if B_pad >= 256:
            TB = min(TB, _round_up((B_pad + 1) // 2, 8))
        grid = (B_pad + TB - 1) // TB          # last tile may be ragged (rows independent)

        cost = pl.CostEstimate(
            flops=2 * B_pad * D_IN * N_H_PAD + 2 * B_pad * N_H_PAD * N_OUT,
            transcendentals=B_pad * (2 * N_H_PAD + 2 * N_OUT),
            bytes_accessed=(B_pad * D_IN * 4 + B_pad * N_OUT * 4
                            + D_IN * N_H_PAD * 2 + N_H_PAD * 4 + N_H_PAD * N_OUT * 2),
        )

        out = pl.pallas_call(
            _kernel,
            out_shape=jax.ShapeDtypeStruct((B_pad, N_OUT), jnp.float32),
            grid=(grid,),
            in_specs=[
                pl.BlockSpec((TB, D_IN), lambda i: (i, 0)),         # x tile (f32)
                pl.BlockSpec((D_IN, N_H_PAD), lambda i: (0, 0)),    # folded weight (resident)
                pl.BlockSpec((1, N_H_PAD), lambda i: (0, 0)),       # folded bias (resident)
                pl.BlockSpec((N_H_PAD, N_OUT), lambda i: (0, 0)),   # w4.T (resident)
            ],
            out_specs=pl.BlockSpec((TB, N_OUT), lambda i: (i, 0)),
            compiler_params=pltpu.CompilerParams(
                dimension_semantics=("parallel",)),                 # shard over v7x TCs
            cost_estimate=cost,
        )(x_flat, wa_p, ba_p, w4t_p)
        return out[:B]

    return forward


def _reference(x, w0, w1, b1, w2, w4):
    """Pure-JAX reference matching the PyTorch module semantics (f32, unfused)."""
    B = x.shape[0]
    xv = x.reshape(B, C_IN, L_IN).astype(jnp.float32)
    h = jax.lax.conv_general_dilated(xv, w0, (1,), 'VALID',
                                     dimension_numbers=('NCH', 'OIH', 'NCH'))
    y = jax.lax.conv_general_dilated(h, w1, (1,), 'VALID',
                                     dimension_numbers=('NCH', 'OIH', 'NCH'))
    y = y[:, :, 0] + b1[None, :]
    z = jax.nn.sigmoid(y @ w2.T)
    logits = z @ w4.T
    return jax.nn.log_softmax(logits, axis=1)


def _init_params(key):
    """Deterministic synthetic params with PyTorch-default-style uniform ranges."""
    ks = jax.random.split(key, 5)

    def u(k, shape, fan_in):
        bound = 1.0 / jnp.sqrt(jnp.float32(fan_in))
        return jax.random.uniform(k, shape, jnp.float32, -bound, bound)

    w0 = u(ks[0], (C0, C_IN, K0), C_IN * K0)        # Conv1d f0 weight (14,16,3)
    w1 = u(ks[1], (C1, C0, K1), C0 * K1)            # Conv1d f1 weight (10,14,47)
    b1 = u(ks[2], (C1,), C0 * K1)                   # Conv1d f1 bias   (10,)
    w2 = u(ks[3], (N_H, C1), C1)                    # Linear f2 weight (73,10)
    w4 = u(ks[4], (N_OUT, N_H), N_H)                # Linear f4 weight (10,73)
    return w0, w1, b1, w2, w4


if __name__ == "__main__":
    key = jax.random.PRNGKey(0)
    k_params, k_x = jax.random.split(key)
    w0, w1, b1, w2, w4 = _init_params(k_params)

    # MNIST-like NCHW input: (B=2, 1, 28, 28) -> 784 = 16*49 elements per sample.
    x = jax.random.normal(k_x, (2, 1, 28, 28), jnp.float32)

    forward = make_conv1d_then_linear_64(w0, w1, b1, w2, w4)
    out = jax.block_until_ready(forward(x))

    ref = jax.block_until_ready(_reference(x, w0, w1, b1, w2, w4))
    err = float(jnp.max(jnp.abs(out - ref)))
    if not (out.shape == (2, N_OUT) and err < 5e-2):
        raise RuntimeError(f"mismatch: shape={out.shape} max_abs_err={err}")
    print("KERNEL_OK")
</pallas_src>

<mosaic_0001>
module attributes {stable_mosaic.version = 11 : i64} {
  func.func @_kernel(%arg0: i32, %arg1: memref<8x784xf32, #tpu.memory_space<vmem>>, %arg2: memref<784x128xbf16, #tpu.memory_space<vmem>>, %arg3: memref<1x128xf32, #tpu.memory_space<vmem>>, %arg4: memref<128x10xbf16, #tpu.memory_space<vmem>>, %arg5: memref<8x10xf32, #tpu.memory_space<vmem>>) attributes {dimension_semantics = [#tpu.dimension_semantics<parallel>], iteration_bounds = array<i64: 1>, scalar_prefetch = 0 : i64, scratch_operands = 0 : i64, tpu.core_type = #tpu.core_type<tc>, window_params = [{transform_indices = @transform_0, window_bounds = array<i64: 8, 784>}, {pipeline_mode = #tpu.pipeline_mode<synchronous>, transform_indices = @transform_1, window_bounds = array<i64: 784, 128>}, {pipeline_mode = #tpu.pipeline_mode<synchronous>, transform_indices = @transform_2, window_bounds = array<i64: 1, 128>}, {pipeline_mode = #tpu.pipeline_mode<synchronous>, transform_indices = @transform_3, window_bounds = array<i64: 128, 10>}, {transform_indices = @transform_4, window_bounds = array<i64: 8, 10>}]} {
    %c0 = arith.constant 0 : index
    %c0_0 = arith.constant 0 : index
    %0 = vector.load %arg1[%c0, %c0_0] : memref<8x784xf32, #tpu.memory_space<vmem>>, vector<8x784xf32>
    %1 = arith.truncf %0 : vector<8x784xf32> to vector<8x784xbf16>
    %c0_1 = arith.constant 0 : index
    %c0_2 = arith.constant 0 : index
    %2 = vector.load %arg2[%c0_1, %c0_2] : memref<784x128xbf16, #tpu.memory_space<vmem>>, vector<784x128xbf16>
    %cst = arith.constant dense<0.000000e+00> : vector<8x128xf32>
    %3 = tpu.matmul %1, %2, %cst {dimension_numbers = #tpu.dot_dimension_numbers<[1], [0], [0], [1], [0, 0, 1, 1], [], []>} : vector<8x784xbf16>, vector<784x128xbf16>, vector<8x128xf32> -> vector<8x128xf32>
    %c0_3 = arith.constant 0 : index
    %c0_4 = arith.constant 0 : index
    %4 = vector.load %arg3[%c0_3, %c0_4] : memref<1x128xf32, #tpu.memory_space<vmem>>, vector<1x128xf32>
    %5 = vector.broadcast %4 : vector<1x128xf32> to vector<8x128xf32>
    %6 = arith.addf %3, %5 : vector<8x128xf32>
    %cst_5 = arith.constant 0.000000e+00 : f32
    %7 = vector.broadcast %cst_5 : f32 to vector<8x128xf32>
    %8 = arith.subf %7, %6 : vector<8x128xf32>
    %9 = math.exp %8 : vector<8x128xf32>
    %cst_6 = arith.constant 1.000000e+00 : f32
    %10 = vector.broadcast %cst_6 : f32 to vector<8x128xf32>
    %11 = arith.addf %10, %9 : vector<8x128xf32>
    %12 = tpu.reciprocal %11 {approx = true} : vector<8x128xf32> -> vector<8x128xf32>
    %13 = arith.truncf %12 : vector<8x128xf32> to vector<8x128xbf16>
    %c0_7 = arith.constant 0 : index
    %c0_8 = arith.constant 0 : index
    %14 = vector.load %arg4[%c0_7, %c0_8] : memref<128x10xbf16, #tpu.memory_space<vmem>>, vector<128x10xbf16>
    %cst_9 = arith.constant dense<0.000000e+00> : vector<8x10xf32>
    %15 = tpu.matmul %13, %14, %cst_9 {dimension_numbers = #tpu.dot_dimension_numbers<[1], [0], [0], [1], [0, 0, 1, 1], [], []>} : vector<8x128xbf16>, vector<128x10xbf16>, vector<8x10xf32> -> vector<8x10xf32>
    %cst_10 = arith.constant dense<0xFF800000> : vector<8xf32>
    %16 = vector.multi_reduction <maximumf>, %15, %cst_10 [1] : vector<8x10xf32> to vector<8xf32>
    %17 = vector.shape_cast %16 : vector<8xf32> to vector<8x1xf32>
    %18 = vector.broadcast %17 : vector<8x1xf32> to vector<8x10xf32>
    %19 = arith.subf %15, %18 : vector<8x10xf32>
    %20 = math.exp %19 : vector<8x10xf32>
    %cst_11 = arith.constant dense<0.000000e+00> : vector<8xf32>
    %21 = vector.multi_reduction <add>, %20, %cst_11 [1] : vector<8x10xf32> to vector<8xf32>
    %22 = vector.shape_cast %21 : vector<8xf32> to vector<8x1xf32>
    %23 = math.log %22 : vector<8x1xf32>
    %24 = vector.broadcast %23 : vector<8x1xf32> to vector<8x10xf32>
    %25 = arith.subf %19, %24 : vector<8x10xf32>
    %c0_12 = arith.constant 0 : index
    %c0_13 = arith.constant 0 : index
    %26 = vector.load %arg5[%c0_12, %c0_13] : memref<8x10xf32, #tpu.memory_space<vmem>>, vector<8x10xf32>
    tpu.vector_store %arg5[%c0_12, %c0_13], %25 {strides = array<i32>} : memref<8x10xf32, #tpu.memory_space<vmem>>, vector<8x10xf32>,
    return
  }
  func.func @transform_0(%arg0: i32) -> (i32, i32) {
    %c0_i32 = arith.constant 0 : i32
    %c0_i32_0 = arith.constant 0 : i32
    return %arg0, %c0_i32 : i32, i32
  }
  func.func @transform_1(%arg0: i32) -> (i32, i32) {
    %c0_i32 = arith.constant 0 : i32
    %c0_i32_0 = arith.constant 0 : i32
    %c0_i32_1 = arith.constant 0 : i32
    return %c0_i32, %c0_i32_0 : i32, i32
  }
  func.func @transform_2(%arg0: i32) -> (i32, i32) {
    %c0_i32 = arith.constant 0 : i32
    %c0_i32_0 = arith.constant 0 : i32
    %c0_i32_1 = arith.constant 0 : i32
    return %c0_i32, %c0_i32_0 : i32, i32
  }
  func.func @transform_3(%arg0: i32) -> (i32, i32) {
    %c0_i32 = arith.constant 0 : i32
    %c0_i32_0 = arith.constant 0 : i32
    %c0_i32_1 = arith.constant 0 : i32
    return %c0_i32, %c0_i32_0 : i32, i32
  }
  func.func @transform_4(%arg0: i32) -> (i32, i32) {
    %c0_i32 = arith.constant 0 : i32
    %c0_i32_0 = arith.constant 0 : i32
    return %arg0, %c0_i32 : i32, i32
  }
}

</mosaic_0001>

<llo_original>
// kernel: forward.1
$region0: #{forward.1}
  #allocation0 [shape = 'u32[]', space=smem, size = 0x4, offset = 0x4, fixed_abs, tag = 'smem constant byte address 0x4 - core index']
  #allocation1 [shape = 'u32[144,128]{1,0:T(1,128)}', space=vmem, size = 0x12000, scoped, tag = 'internal scratch']
  %s0 = inlined_call_operand.vmem [shape: f32[8,784], index: 0, kind: input, shape index: {}]
  %s1 = inlined_call_operand.hbm [shape: bf16[784,128], index: 1, kind: input, shape index: {}]
  %s2 = inlined_call_operand.vmem [shape: f32[1,128], index: 2, kind: input, shape index: {}]
  %s3 = inlined_call_operand.vmem [shape: bf16[128,10], index: 3, kind: input, shape index: {}]
  %s4 = inlined_call_operand.vmem [shape: f32[8,10], index: 4, kind: output, shape index: {}]
  %s5 = sld [smem:[#allocation0]]
  $region30: #{forward.1} parent=0
    _
  %s7 = ssub.s32 1, %s5
  %s8 = scalar_select 0, %s7, %s5
  $region1: #{forward.1} parent=0
    #allocation2 [shape = 'u8[200704]{0}', space=vmem, size = 0x31000, scoped, tag = 'input window, operand 1, single buffered']
    #allocation3 [shape = 's32[1]{0}', space=sflag, size = 0x4, scoped, tag = 'scoped memory for forward.1']
    %9 = vsyncpa [#allocation3], 0
    // Predicated region
    $region2: #{forward.1} parent=1 // pred_check
      _
    $region3: #{forward.1} parent=1 // pred_check_branch
      %11 = sbr.rel (0) target = $region5
    $region4: #{forward.1} parent=1 // pred_region
      _
    $region5: #{forward.1} parent=1 // pred_fallthru
      _
    // Predicated region
    $region6: #{forward.1} parent=1 // pred_check
      _
    $region7: #{forward.1} parent=1 // pred_check_branch
      %13 = sbr.rel (0) target = $region9
    $region8: #{forward.1} parent=1 // pred_region
      %s15 = ssub.s32 6272, 6272
      %16 = vsyncadd [#allocation3], %s15
      %s17 = sshll.u32 [#allocation2], 4
      %s18 = int_to_ptr.vmem [resolvable:$true] %s17
      %23 = dma.hbm_to_vmem [thread:$0]  %s1, 6272, %s18, [#allocation3], 64, 64, 4
    $region9: #{forward.1} parent=1 // pred_fallthru
      _
    // Predicated region
    $region10: #{forward.1} parent=1 // pred_check
      _
    $region11: #{forward.1} parent=1 // pred_check_branch
      %25 = sbr.rel (0) target = $region13
    $region12: #{forward.1} parent=1 // pred_region
      _
    $region13: #{forward.1} parent=1 // pred_fallthru
      _
    // Predicated region
    $region14: #{forward.1} parent=1 // pred_check
      _
    $region15: #{forward.1} parent=1 // pred_check_branch
      %27 = sbr.rel (0) target = $region17
    $region16: #{forward.1} parent=1 // pred_region
      _
    $region17: #{forward.1} parent=1 // pred_fallthru
      _
    // Predicated region
    $region18: #{forward.1} parent=1 // pred_check
      _
    $region19: #{forward.1} parent=1 // pred_check_branch
      %29 = sbr.rel (0) target = $region21
    $region20: #{forward.1} parent=1 // pred_region
      %30 = dma.done [#allocation3], 6272
    $region21: #{forward.1} parent=1 // pred_fallthru
      _
    %v32 = vld [vmem:[%s0] sm:$0xff]
    %v33 = vld [vmem:[%s0 + $0x8] sm:$0xff]
    %v34 = vld [vmem:[%s0 + $0x10] sm:$0xff]
    %v35 = vld [vmem:[%s0 + $0x18] sm:$0xff]
    %v36 = vld [vmem:[%s0 + $0x20] sm:$0xff]
    %v37 = vld [vmem:[%s0 + $0x28] sm:$0xff]
    %v38 = vld [vmem:[%s0 + $0x30] sm:$0xff]
    %v39 = vpack.c.bf16 %v32, %v32
    %v40 = vpack.c.bf16 %v33, %v33
    %v41 = vpack.c.bf16 %v34, %v34
    %v42 = vpack.c.bf16 %v35, %v35
    %v43 = vpack.c.bf16 %v36, %v36
    %v44 = vpack.c.bf16 %v37, %v37
    %v45 = vpack.c.bf16 %v38, %v38
    %v46 = vld [vmem:[#allocation2] sm:$0xf]
    %v47 = vld [vmem:[#allocation2 + $0x4] sm:$0xf]
    %v48 = vld [vmem:[#allocation2 + $0x8] sm:$0xf]
    %v49 = vld [vmem:[#allocation2 + $0xc] sm:$0xf]
    %v50 = vld [vmem:[#allocation2 + $0x10] sm:$0xf]
    %v51 = vld [vmem:[#allocation2 + $0x14] sm:$0xf]
    %v52 = vld [vmem:[#allocation2 + $0x18] sm:$0xf]
    %v53 = vld [vmem:[#allocation2 + $0x1c] sm:$0xf]
    %v54 = vld [vmem:[#allocation2 + $0x20] sm:$0xf]
    %v55 = vld [vmem:[#allocation2 + $0x24] sm:$0xf]
    %v56 = vld [vmem:[#allocation2 + $0x28] sm:$0xf]
    %v57 = vld [vmem:[#allocation2 + $0x2c] sm:$0xf]
    %v58 = vld [vmem:[#allocation2 + $0x30] sm:$0xf]
    %v59 = vld [vmem:[#allocation2 + $0x34] sm:$0xf]
    %v60 = vld [vmem:[#allocation2 + $0x38] sm:$0xf]
    %v61 = vld [vmem:[#allocation2 + $0x3c] sm:$0xf]
    %v62 = vld [vmem:[#allocation2 + $0x40] sm:$0xf]
    %v63 = vld [vmem:[#allocation2 + $0x44] sm:$0xf]
    %v64 = vld [vmem:[#allocation2 + $0x48] sm:$0xf]
    %v65 = vld [vmem:[#allocation2 + $0x4c] sm:$0xf]
    %v66 = vld [vmem:[#allocation2 + $0x50] sm:$0xf]
    %v67 = vld [vmem:[#allocation2 + $0x54] sm:$0xf]
    %v68 = vld [vmem:[#allocation2 + $0x58] sm:$0xf]
    %v69 = vld [vmem:[#allocation2 + $0x5c] sm:$0xf]
    %v70 = vld [vmem:[#allocation2 + $0x60] sm:$0xf]
    %v71 = vld [vmem:[#allocation2 + $0x64] sm:$0xf]
    %v72 = vld [vmem:[#allocation2 + $0x68] sm:$0xf]
    %v73 = vld [vmem:[#allocation2 + $0x6c] sm:$0xf]
    %v74 = vld [vmem:[#allocation2 + $0x70] sm:$0xf]
    %v75 = vld [vmem:[#allocation2 + $0x74] sm:$0xf]
    %v76 = vld [vmem:[#allocation2 + $0x78] sm:$0xf]
    %v77 = vld [vmem:[#allocation2 + $0x7c] sm:$0xf]
    %v78 = vld [vmem:[#allocation2 + $0x80] sm:$0xf]
    %v79 = vld [vmem:[#allocation2 + $0x84] sm:$0xf]
    %v80 = vld [vmem:[#allocation2 + $0x88] sm:$0xf]
    %v81 = vld [vmem:[#allocation2 + $0x8c] sm:$0xf]
    %v82 = vld [vmem:[#allocation2 + $0x90] sm:$0xf]
    %v83 = vld [vmem:[#allocation2 + $0x94] sm:$0xf]
    %v84 = vld [vmem:[#allocation2 + $0x98] sm:$0xf]
    %v85 = vld [vmem:[#allocation2 + $0x9c] sm:$0xf]
    %v86 = vld [vmem:[#allocation2 + $0xa0] sm:$0xf]
    %v87 = vld [vmem:[#allocation2 + $0xa4] sm:$0xf]
    %v88 = vld [vmem:[#allocation2 + $0xa8] sm:$0xf]
    %v89 = vld [vmem:[#allocation2 + $0xac] sm:$0xf]
    %v90 = vld [vmem:[#allocation2 + $0xb0] sm:$0xf]
    %v91 = vld [vmem:[#allocation2 + $0xb4] sm:$0xf]
    %v92 = vld [vmem:[#allocation2 + $0xb8] sm:$0xf]
    %v93 = vld [vmem:[#allocation2 + $0xbc] sm:$0xf]
    %v94 = vld [vmem:[#allocation2 + $0xc0] sm:$0xf]
    %v95 = vld [vmem:[#allocation2 + $0xc4] sm:$0xf]
    %v96 = vld [vmem:[#allocation2 + $0xc8] sm:$0xf]
    %v97 = vld [vmem:[#allocation2 + $0xcc] sm:$0xf]
    %v98 = vld [vmem:[#allocation2 + $0xd0] sm:$0xf]
    %v99 = vld [vmem:[#allocation2 + $0xd4] sm:$0xf]
    %v100 = vld [vmem:[#allocation2 + $0xd8] sm:$0xf]
    %v101 = vld [vmem:[#allocation2 + $0xdc] sm:$0xf]
    %v102 = vld [vmem:[#allocation2 + $0xe0] sm:$0xf]
    %v103 = vld [vmem:[#allocation2 + $0xe4] sm:$0xf]
    %v104 = vld [vmem:[#allocation2 + $0xe8] sm:$0xf]
    %v105 = vld [vmem:[#allocation2 + $0xec] sm:$0xf]
    %v106 = vld [vmem:[#allocation2 + $0xf0] sm:$0xf]
    %v107 = vld [vmem:[#allocation2 + $0xf4] sm:$0xf]
    %v108 = vld [vmem:[#allocation2 + $0xf8] sm:$0xf]
    %v109 = vld [vmem:[#allocation2 + $0xfc] sm:$0xf]
    %v110 = vld [vmem:[#allocation2 + $0x100] sm:$0xf]
    %v111 = vld [vmem:[#allocation2 + $0x104] sm:$0xf]
    %v112 = vld [vmem:[#allocation2 + $0x108] sm:$0xf]
    %v113 = vld [vmem:[#allocation2 + $0x10c] sm:$0xf]
    %v114 = vld [vmem:[#allocation2 + $0x110] sm:$0xf]
    %v115 = vld [vmem:[#allocation2 + $0x114] sm:$0xf]
    %v116 = vld [vmem:[#allocation2 + $0x118] sm:$0xf]
    %v117 = vld [vmem:[#allocation2 + $0x11c] sm:$0xf]
    %v118 = vld [vmem:[#allocation2 + $0x120] sm:$0xf]
    %v119 = vld [vmem:[#allocation2 + $0x124] sm:$0xf]
    %v120 = vld [vmem:[#allocation2 + $0x128] sm:$0xf]
    %v121 = vld [vmem:[#allocation2 + $0x12c] sm:$0xf]
    %v122 = vld [vmem:[#allocation2 + $0x130] sm:$0xf]
    %v123 = vld [vmem:[#allocation2 + $0x134] sm:$0xf]
    %v124 = vld [vmem:[#allocation2 + $0x138] sm:$0xf]
    %v125 = vld [vmem:[#allocation2 + $0x13c] sm:$0xf]
    %v126 = vld [vmem:[#allocation2 + $0x140] sm:$0xf]
    %v127 = vld [vmem:[#allocation2 + $0x144] sm:$0xf]
    %v128 = vld [vmem:[#allocation2 + $0x148] sm:$0xf]
    %v129 = vld [vmem:[#allocation2 + $0x14c] sm:$0xf]
    %v130 = vld [vmem:[#allocation2 + $0x150] sm:$0xf]
    %v131 = vld [vmem:[#allocation2 + $0x154] sm:$0xf]
    %v132 = vld [vmem:[#allocation2 + $0x158] sm:$0xf]
    %v133 = vld [vmem:[#allocation2 + $0x15c] sm:$0xf]
    %v134 = vld [vmem:[#allocation2 + $0x160] sm:$0xf]
    %v135 = vld [vmem:[#allocation2 + $0x164] sm:$0xf]
    %v136 = vld [vmem:[#allocation2 + $0x168] sm:$0xf]
    %v137 = vld [vmem:[#allocation2 + $0x16c] sm:$0xf]
    %v138 = vld [vmem:[#allocation2 + $0x170] sm:$0xf]
    %v139 = vld [vmem:[#allocation2 + $0x174] sm:$0xf]
    %v140 = vld [vmem:[#allocation2 + $0x178] sm:$0xf]
    %v141 = vld [vmem:[#allocation2 + $0x17c] sm:$0xf]
    %v142 = vld [vmem:[#allocation2 + $0x180] sm:$0xf]
    %v143 = vld [vmem:[#allocation2 + $0x184] sm:$0xf]
    %v144 = vld [vmem:[%s2] sm:$0x1]
    %v146 = vlaneseq
    %v147 = vshrl.u32 %v146, 7
    %v148 = vsub.s32 0, %v147
    %v149 = vrot.slane %v144, %v148
    %v249 = vunpack.c.l.b16 %v46
    %v250 = vunpack.c.l.b16 %v47
    %v251 = vunpack.c.l.b16 %v48
    %v252 = vunpack.c.l.b16 %v49
    %v253 = vunpack.c.l.b16 %v50
    %v254 = vunpack.c.l.b16 %v51
    %v255 = vunpack.c.l.b16 %v52
    %v256 = vunpack.c.l.b16 %v53
    %v257 = vunpack.c.l.b16 %v54
    %v258 = vunpack.c.l.b16 %v55
    %v259 = vunpack.c.l.b16 %v56
    %v260 = vunpack.c.l.b16 %v57
    %v261 = vunpack.c.l.b16 %v58
    %v262 = vunpack.c.l.b16 %v59
    %v263 = vunpack.c.l.b16 %v60
    %v264 = vunpack.c.l.b16 %v61
    %v265 = vunpack.c.l.b16 %v62
    %v266 = vunpack.c.l.b16 %v63
    %v267 = vunpack.c.l.b16 %v64
    %v268 = vunpack.c.l.b16 %v65
    %v269 = vunpack.c.l.b16 %v66
    %v270 = vunpack.c.l.b16 %v67
    %v271 = vunpack.c.l.b16 %v68
    %v272 = vunpack.c.l.b16 %v69
    %v273 = vunpack.c.l.b16 %v70
    %v274 = vunpack.c.l.b16 %v71
    %v275 = vunpack.c.l.b16 %v72
    %v276 = vunpack.c.l.b16 %v73
    %v277 = vunpack.c.l.b16 %v74
    %v278 = vunpack.c.l.b16 %v75
    %v279 = vunpack.c.l.b16 %v76
    %v280 = vunpack.c.l.b16 %v77
    %v281 = vunpack.c.l.b16 %v78
    %v282 = vunpack.c.l.b16 %v79
    %v283 = vunpack.c.l.b16 %v80
    %v284 = vunpack.c.l.b16 %v81
    %v285 = vunpack.c.l.b16 %v82
    %v286 = vunpack.c.l.b16 %v83
    %v287 = vunpack.c.l.b16 %v84
    %v288 = vunpack.c.l.b16 %v85
    %v289 = vunpack.c.l.b16 %v86
    %v290 = vunpack.c.l.b16 %v87
    %v291 = vunpack.c.l.b16 %v88
    %v292 = vunpack.c.l.b16 %v89
    %v293 = vunpack.c.l.b16 %v90
    %v294 = vunpack.c.l.b16 %v91
    %v295 = vunpack.c.l.b16 %v92
    %v296 = vunpack.c.l.b16 %v93
    %v297 = vunpack.c.l.b16 %v94
    %v298 = vunpack.c.l.b16 %v95
    %v299 = vunpack.c.l.b16 %v96
    %v300 = vunpack.c.l.b16 %v97
    %v301 = vunpack.c.l.b16 %v98
    %v302 = vunpack.c.l.b16 %v99
    %v303 = vunpack.c.l.b16 %v100
    %v304 = vunpack.c.l.b16 %v101
    %v305 = vunpack.c.l.b16 %v102
    %v306 = vunpack.c.l.b16 %v103
    %v307 = vunpack.c.l.b16 %v104
    %v308 = vunpack.c.l.b16 %v105
    %v309 = vunpack.c.l.b16 %v106
    %v310 = vunpack.c.l.b16 %v107
    %v311 = vunpack.c.l.b16 %v108
    %v312 = vunpack.c.l.b16 %v109
    %v313 = vunpack.c.l.b16 %v110
    %v314 = vunpack.c.l.b16 %v111
    %v315 = vunpack.c.l.b16 %v112
    %v316 = vunpack.c.l.b16 %v113
    %v317 = vunpack.c.l.b16 %v114
    %v318 = vunpack.c.l.b16 %v115
    %v319 = vunpack.c.l.b16 %v116
    %v320 = vunpack.c.l.b16 %v117
    %v321 = vunpack.c.l.b16 %v118
    %v322 = vunpack.c.l.b16 %v119
    %v323 = vunpack.c.l.b16 %v120
    %v324 = vunpack.c.l.b16 %v121
    %v325 = vunpack.c.l.b16 %v122
    %v326 = vunpack.c.l.b16 %v123
    %v327 = vunpack.c.l.b16 %v124
    %v328 = vunpack.c.l.b16 %v125
    %v329 = vunpack.c.l.b16 %v126
    %v330 = vunpack.c.l.b16 %v127
    %v331 = vunpack.c.l.b16 %v128
    %v332 = vunpack.c.l.b16 %v129
    %v333 = vunpack.c.l.b16 %v130
    %v334 = vunpack.c.l.b16 %v131
    %v335 = vunpack.c.l.b16 %v132
    %v336 = vunpack.c.l.b16 %v133
    %v337 = vunpack.c.l.b16 %v134
    %v338 = vunpack.c.l.b16 %v135
    %v339 = vunpack.c.l.b16 %v136
    %v340 = vunpack.c.l.b16 %v137
    %v341 = vunpack.c.l.b16 %v138
    %v342 = vunpack.c.l.b16 %v139
    %v343 = vunpack.c.l.b16 %v140
    %v344 = vunpack.c.l.b16 %v141
    %v345 = vunpack.c.l.b16 %v142
    %v346 = vunpack.c.l.b16 %v143
    %v347 = vpack.c.b16 %v250, %v249
    %v348 = vpack.c.b16 %v252, %v251
    %v349 = vpack.c.b16 %v254, %v253
    %v350 = vpack.c.b16 %v256, %v255
    %v351 = vpack.c.b16 %v258, %v257
    %v352 = vpack.c.b16 %v260, %v259
    %v353 = vpack.c.b16 %v262, %v261
    %v354 = vpack.c.b16 %v264, %v263
    %v355 = vpack.c.b16 %v266, %v265
    %v356 = vpack.c.b16 %v268, %v267
    %v357 = vpack.c.b16 %v270, %v269
    %v358 = vpack.c.b16 %v272, %v271
    %v359 = vpack.c.b16 %v274, %v273
    %v360 = vpack.c.b16 %v276, %v275
    %v361 = vpack.c.b16 %v278, %v277
    %v362 = vpack.c.b16 %v280, %v279
    %v363 = vpack.c.b16 %v282, %v281
    %v364 = vpack.c.b16 %v284, %v283
    %v365 = vpack.c.b16 %v286, %v285
    %v366 = vpack.c.b16 %v288, %v287
    %v367 = vpack.c.b16 %v290, %v289
    %v368 = vpack.c.b16 %v292, %v291
    %v369 = vpack.c.b16 %v294, %v293
    %v370 = vpack.c.b16 %v296, %v295
    %v371 = vpack.c.b16 %v298, %v297
    %v372 = vpack.c.b16 %v300, %v299
    %v373 = vpack.c.b16 %v302, %v301
    %v374 = vpack.c.b16 %v304, %v303
    %v375 = vpack.c.b16 %v306, %v305
    %v376 = vpack.c.b16 %v308, %v307
    %v377 = vpack.c.b16 %v310, %v309
    %v378 = vpack.c.b16 %v312, %v311
    %v379 = vpack.c.b16 %v314, %v313
    %v380 = vpack.c.b16 %v316, %v315
    %v381 = vpack.c.b16 %v318, %v317
    %v382 = vpack.c.b16 %v320, %v319
    %v383 = vpack.c.b16 %v322, %v321
    %v384 = vpack.c.b16 %v324, %v323
    %v385 = vpack.c.b16 %v326, %v325
    %v386 = vpack.c.b16 %v328, %v327
    %v387 = vpack.c.b16 %v330, %v329
    %v388 = vpack.c.b16 %v332, %v331
    %v389 = vpack.c.b16 %v334, %v333
    %v390 = vpack.c.b16 %v336, %v335
    %v391 = vpack.c.b16 %v338, %v337
    %v392 = vpack.c.b16 %v340, %v339
    %v393 = vpack.c.b16 %v342, %v341
    %v394 = vpack.c.b16 %v344, %v343
    %v395 = vpack.c.b16 %v346, %v345
    %vm445 = vcmask 130048
    %v447 = vsel %vm445, %v45, 0
    %449 = vmatprep.subr.bf16.mxu0 0
    %450 = vmatpush1.bf16.msra.mxu0 %v347
    %451 = vmatprep.subr.bf16.mxu0 0
    %452 = vmatpush1.bf16.msra.mxu0 %v348
    %453 = vmatprep.subr.bf16.mxu0 0
    %454 = vmatpush1.bf16.msra.mxu0 %v349
    %455 = vmatprep.subr.bf16.mxu0 0
    %456 = vmatpush1.bf16.msra.mxu0 %v350
    %457 = vmatprep.subr.bf16.mxu0 0
    %458 = vmatpush1.bf16.msra.mxu0 %v351
    %459 = vmatprep.subr.bf16.mxu0 0
    %460 = vmatpush1.bf16.msra.mxu0 %v352
    %461 = vmatprep.subr.bf16.mxu0 0
    %462 = vmatpush1.bf16.msra.mxu0 %v353
    %463 = vmatprep.subr.bf16.mxu0 0
    %464 = vmatpush1.bf16.msra.mxu0 %v354
    %465 = vmatprep.subr.bf16.mxu0 0
    %466 = vmatpush1.bf16.msra.mxu0 %v355
    %467 = vmatprep.subr.bf16.mxu0 0
    %468 = vmatpush1.bf16.msra.mxu0 %v356
    %469 = vmatprep.subr.bf16.mxu0 0
    %470 = vmatpush1.bf16.msra.mxu0 %v357
    %471 = vmatprep.subr.bf16.mxu0 0
    %472 = vmatpush1.bf16.msra.mxu0 %v358
    %473 = vmatprep.subr.bf16.mxu0 0
    %474 = vmatpush1.bf16.msra.mxu0 %v359
    %475 = vmatprep.subr.bf16.mxu0 0
    %476 = vmatpush1.bf16.msra.mxu0 %v360
    %477 = vmatprep.subr.bf16.mxu0 0
    %478 = vmatpush1.bf16.msra.mxu0 %v361
    %479 = vmatprep.subr.bf16.mxu0 0
    %480 = vmatpush1.bf16.msra.mxu0 %v362
    %481 = vmatprep.mubr.bf16.mxu0 %v40
    %482 = vmatmul.mubr.bf16.gmra.mrb[0].mxu0 %v39
    %v483 = vpop.f32.mrb[0].mxu0
    %v484 = vadd.f32 %v149, %v483
    %v485 = vpop.f32.mrb[0].mxu0
    %v486 = vpop.f32.mrb[0].mxu0
    %v487 = vpop.f32.mrb[0].mxu0
    %488 = vdwg.mxu0
    %489 = vmatprep.subr.bf16.mxu0 0
    %490 = vmatpush1.bf16.msra.mxu0 %v363
    %491 = vmatprep.subr.bf16.mxu0 0
    %492 = vmatpush1.bf16.msra.mxu0 %v364
    %493 = vmatprep.subr.bf16.mxu0 0
    %494 = vmatpush1.bf16.msra.mxu0 %v365
    %495 = vmatprep.subr.bf16.mxu0 0
    %496 = vmatpush1.bf16.msra.mxu0 %v366
    %497 = vmatprep.subr.bf16.mxu0 0
    %498 = vmatpush1.bf16.msra.mxu0 %v367
    %499 = vmatprep.subr.bf16.mxu0 0
    %500 = vmatpush1.bf16.msra.mxu0 %v368
    %501 = vmatprep.subr.bf16.mxu0 0
    %502 = vmatpush1.bf16.msra.mxu0 %v369
    %503 = vmatprep.subr.bf16.mxu0 0
    %504 = vmatpush1.bf16.msra.mxu0 %v370
    %505 = vmatprep.subr.bf16.mxu0 0
    %506 = vmatpush1.bf16.msra.mxu0 %v371
    %507 = vmatprep.subr.bf16.mxu0 0
    %508 = vmatpush1.bf16.msra.mxu0 %v372
    %509 = vmatprep.subr.bf16.mxu0 0
    %510 = vmatpush1.bf16.msra.mxu0 %v373
    %511 = vmatprep.subr.bf16.mxu0 0
    %512 = vmatpush1.bf16.msra.mxu0 %v374
    %513 = vmatprep.subr.bf16.mxu0 0
    %514 = vmatpush1.bf16.msra.mxu0 %v375
    %515 = vmatprep.subr.bf16.mxu0 0
    %516 = vmatpush1.bf16.msra.mxu0 %v376
    %517 = vmatprep.subr.bf16.mxu0 0
    %518 = vmatpush1.bf16.msra.mxu0 %v377
    %519 = vmatprep.subr.bf16.mxu0 0
    %520 = vmatpush1.bf16.msra.mxu0 %v378
    %521 = vmatprep.mubr.bf16.mxu0 %v42
    %522 = vmatmul.mubr.bf16.gmra.mrb[0].mxu0 %v41
    %v523 = vpop.f32.mrb[0].mxu0
    %v524 = vadd.f32 %v484, %v523
    %v525 = vpop.f32.mrb[0].mxu0
    %v526 = vpop.f32.mrb[0].mxu0
    %v527 = vpop.f32.mrb[0].mxu0
    %528 = vdwg.mxu0
    %529 = vmatprep.subr.bf16.mxu0 0
    %530 = vmatpush1.bf16.msra.mxu0 %v379
    %531 = vmatprep.subr.bf16.mxu0 0
    %532 = vmatpush1.bf16.msra.mxu0 %v380
    %533 = vmatprep.subr.bf16.mxu0 0
    %534 = vmatpush1.bf16.msra.mxu0 %v381
    %535 = vmatprep.subr.bf16.mxu0 0
    %536 = vmatpush1.bf16.msra.mxu0 %v382
    %537 = vmatprep.subr.bf16.mxu0 0
    %538 = vmatpush1.bf16.msra.mxu0 %v383
    %539 = vmatprep.subr.bf16.mxu0 0
    %540 = vmatpush1.bf16.msra.mxu0 %v384
    %541 = vmatprep.subr.bf16.mxu0 0
    %542 = vmatpush1.bf16.msra.mxu0 %v385
    %543 = vmatprep.subr.bf16.mxu0 0
    %544 = vmatpush1.bf16.msra.mxu0 %v386
    %545 = vmatprep.subr.bf16.mxu0 0
    %546 = vmatpush1.bf16.msra.mxu0 %v387
    %547 = vmatprep.subr.bf16.mxu0 0
    %548 = vmatpush1.bf16.msra.mxu0 %v388
    %549 = vmatprep.subr.bf16.mxu0 0
    %550 = vmatpush1.bf16.msra.mxu0 %v389
    %551 = vmatprep.subr.bf16.mxu0 0
    %552 = vmatpush1.bf16.msra.mxu0 %v390
    %553 = vmatprep.subr.bf16.mxu0 0
    %554 = vmatpush1.bf16.msra.mxu0 %v391
    %555 = vmatprep.subr.bf16.mxu0 0
    %556 = vmatpush1.bf16.msra.mxu0 %v392
    %557 = vmatprep.subr.bf16.mxu0 0
    %558 = vmatpush1.bf16.msra.mxu0 %v393
    %559 = vmatprep.subr.bf16.mxu0 0
    %560 = vmatpush1.bf16.msra.mxu0 %v394
    %561 = vmatprep.mubr.bf16.mxu0 %v44
    %562 = vmatmul.mubr.bf16.gmra.mrb[0].mxu0 %v43
    %v563 = vpop.f32.mrb[0].mxu0
    %v564 = vadd.f32 %v524, %v563
    %v565 = vpop.f32.mrb[0].mxu0
    %v566 = vpop.f32.mrb[0].mxu0
    %v567 = vpop.f32.mrb[0].mxu0
    %568 = vdwg.mxu0
    %569 = vmatprep.subr.bf16.mxu0 0
    %570 = vmatpush1.bf16.msra.mxu0 %v395
    %571 = vmatprep.subr.bf16.mxu0 0
    %572 = vmatpush1.bf16.msra.mxu0 0
    %573 = vmatprep.subr.bf16.mxu0 0
    %574 = vmatpush1.bf16.msra.mxu0 0
    %575 = vmatprep.subr.bf16.mxu0 0
    %576 = vmatpush1.bf16.msra.mxu0 0
    %577 = vmatprep.subr.bf16.mxu0 0
    %578 = vmatpush1.bf16.msra.mxu0 0
    %579 = vmatprep.subr.bf16.mxu0 0
    %580 = vmatpush1.bf16.msra.mxu0 0
    %581 = vmatprep.subr.bf16.mxu0 0
    %582 = vmatpush1.bf16.msra.mxu0 0
    %583 = vmatprep.subr.bf16.mxu0 0
    %584 = vmatpush1.bf16.msra.mxu0 0
    %585 = vmatprep.subr.bf16.mxu0 0
    %586 = vmatpush1.bf16.msra.mxu0 0
    %587 = vmatprep.subr.bf16.mxu0 0
    %588 = vmatpush1.bf16.msra.mxu0 0
    %589 = vmatprep.subr.bf16.mxu0 0
    %590 = vmatpush1.bf16.msra.mxu0 0
    %591 = vmatprep.subr.bf16.mxu0 0
    %592 = vmatpush1.bf16.msra.mxu0 0
    %593 = vmatprep.subr.bf16.mxu0 0
    %594 = vmatpush1.bf16.msra.mxu0 0
    %595 = vmatprep.subr.bf16.mxu0 0
    %596 = vmatpush1.bf16.msra.mxu0 0
    %597 = vmatprep.subr.bf16.mxu0 0
    %598 = vmatpush1.bf16.msra.mxu0 0
    %599 = vmatprep.subr.bf16.mxu0 0
    %600 = vmatpush1.bf16.msra.mxu0 0
    %601 = vmatprep.mubr.bf16.mxu0 0
    %602 = vmatmul.mubr.bf16.gmra.mrb[0].mxu0 %v447
    %v603 = vpop.f32.mrb[0].mxu0
    %v604 = vadd.f32 %v564, %v603
    %v605 = vpop.f32.mrb[0].mxu0
    %v606 = vpop.f32.mrb[0].mxu0
    %v607 = vpop.f32.mrb[0].mxu0
    %608 = vdwg.mxu0
    %v609 = vsub.f32 0.0, %v604
    %v610 = vmul.f32 %v609, 1.442695
    %v611 = vpow.pop %v610
    %v612 = vadd.f32 %v611, 1.0
    %v613 = vrcp.pop %v612
    %v614 = vpack.c.bf16 %v613, %v613
    %v615 = vld [vmem:[%s3] sm:$0xf]
    %v616 = vld [vmem:[%s3 + $0x4] sm:$0xf]
    %v617 = vld [vmem:[%s3 + $0x8] sm:$0xf]
    %v618 = vld [vmem:[%s3 + $0xc] sm:$0xf]
    %v619 = vld [vmem:[%s3 + $0x10] sm:$0xf]
    %v620 = vld [vmem:[%s3 + $0x14] sm:$0xf]
    %v621 = vld [vmem:[%s3 + $0x18] sm:$0xf]
    %v622 = vld [vmem:[%s3 + $0x1c] sm:$0xf]
    %v623 = vld [vmem:[%s3 + $0x20] sm:$0xf]
    %v624 = vld [vmem:[%s3 + $0x24] sm:$0xf]
    %v625 = vld [vmem:[%s3 + $0x28] sm:$0xf]
    %v626 = vld [vmem:[%s3 + $0x2c] sm:$0xf]
    %v627 = vld [vmem:[%s3 + $0x30] sm:$0xf]
    %v628 = vld [vmem:[%s3 + $0x34] sm:$0xf]
    %v629 = vld [vmem:[%s3 + $0x38] sm:$0xf]
    %v630 = vld [vmem:[%s3 + $0x3c] sm:$0xf]
    %v647 = vunpack.c.l.b16 %v615
    %v648 = vunpack.c.l.b16 %v616
    %v649 = vunpack.c.l.b16 %v617
    %v650 = vunpack.c.l.b16 %v618
    %v651 = vunpack.c.l.b16 %v619
    %v652 = vunpack.c.l.b16 %v620
    %v653 = vunpack.c.l.b16 %v621
    %v654 = vunpack.c.l.b16 %v622
    %v655 = vunpack.c.l.b16 %v623
    %v656 = vunpack.c.l.b16 %v624
    %v657 = vunpack.c.l.b16 %v625
    %v658 = vunpack.c.l.b16 %v626
    %v659 = vunpack.c.l.b16 %v627
    %v660 = vunpack.c.l.b16 %v628
    %v661 = vunpack.c.l.b16 %v629
    %v662 = vunpack.c.l.b16 %v630
    %v663 = vpack.c.b16 %v648, %v647
    %v664 = vpack.c.b16 %v650, %v649
    %v665 = vpack.c.b16 %v652, %v651
    %v666 = vpack.c.b16 %v654, %v653
    %v667 = vpack.c.b16 %v656, %v655
    %v668 = vpack.c.b16 %v658, %v657
    %v669 = vpack.c.b16 %v660, %v659
    %v670 = vpack.c.b16 %v662, %v661
    %679 = vmatprep.subr.bf16.mxu0 0
    %680 = vmatpush1.bf16.msra.mxu0 %v663
    %681 = vmatprep.subr.bf16.mxu0 0
    %682 = vmatpush1.bf16.msra.mxu0 %v664
    %683 = vmatprep.subr.bf16.mxu0 0
    %684 = vmatpush1.bf16.msra.mxu0 %v665
    %685 = vmatprep.subr.bf16.mxu0 0
    %686 = vmatpush1.bf16.msra.mxu0 %v666
    %687 = vmatprep.subr.bf16.mxu0 0
    %688 = vmatpush1.bf16.msra.mxu0 %v667
    %689 = vmatprep.subr.bf16.mxu0 0
    %690 = vmatpush1.bf16.msra.mxu0 %v668
    %691 = vmatprep.subr.bf16.mxu0 0
    %692 = vmatpush1.bf16.msra.mxu0 %v669
    %693 = vmatprep.subr.bf16.mxu0 0
    %694 = vmatpush1.bf16.msra.mxu0 %v670
    %695 = vmatprep.subr.bf16.mxu0 0
    %696 = vmatpush1.bf16.msra.mxu0 0
    %697 = vmatprep.subr.bf16.mxu0 0
    %698 = vmatpush1.bf16.msra.mxu0 0
    %699 = vmatprep.subr.bf16.mxu0 0
    %700 = vmatpush1.bf16.msra.mxu0 0
    %701 = vmatprep.subr.bf16.mxu0 0
    %702 = vmatpush1.bf16.msra.mxu0 0
    %703 = vmatprep.subr.bf16.mxu0 0
    %704 = vmatpush1.bf16.msra.mxu0 0
    %705 = vmatprep.subr.bf16.mxu0 0
    %706 = vmatpush1.bf16.msra.mxu0 0
    %707 = vmatprep.subr.bf16.mxu0 0
    %708 = vmatpush1.bf16.msra.mxu0 0
    %709 = vmatprep.subr.bf16.mxu0 0
    %710 = vmatpush1.bf16.msra.mxu0 0
    %711 = vmatprep.mubr.bf16.mxu0 0
    %712 = vmatmul.mubr.bf16.gmra.mrb[0].mxu0 %v614
    %v713 = vpop.f32.mrb[0].mxu0
    %v714 = vadd.f32 0.0, %v713
    %v715 = vpop.f32.mrb[0].mxu0
    %v716 = vpop.f32.mrb[0].mxu0
    %v717 = vpop.f32.mrb[0].mxu0
    %718 = vdwg.mxu0
    %vm719 = vcmask 80896
    %v720 = vsel %vm719, %v714, -inf
    %721 = vmax.xlane.f32.xlu0 %v720
    %v722 = vpop.xlane.xlu0 %721
    %v723 = vsub.f32 %v714, %v722
    %v724 = vmul.f32 %v723, 1.442695
    %v725 = vpow.pop %v724
    %v726 = vsel %vm719, %v725, 0.0
    %727 = vadd.xlane.f32.xlu0 %v726
    %v728 = vpop.xlane.xlu0 %727
    %v729 = vlog2.pop %v728
    %v730 = vmul.f32 %v729, 0.6931472
    %v731 = vsub.f32 %v723, %v730
    %732 = vst.msk [vmem:[%s4] sm:$0xff] %vm719, %v731
    // Predicated region
    $region22: #{forward.1} parent=1 // pred_check
      _
    $region23: #{forward.1} parent=1 // pred_check_branch
      %734 = sbr.rel (0) target = $region25
    $region24: #{forward.1} parent=1 // pred_region
      _
    $region25: #{forward.1} parent=1 // pred_fallthru
      _
    // Predicated region
    $region26: #{forward.1} parent=1 // pred_check
      _
    $region27: #{forward.1} parent=1 // pred_check_branch
      %736 = sbr.rel (0) target = $region29
    $region28: #{forward.1} parent=1 // pred_region
      _
    $region29: #{forward.1} parent=1 // pred_fallthru
      _
    %737 = vsyncpa [#allocation3], 1

</llo_original>
